<compile_context>
chip_gen: v5e
topology: v5e:2x2
jax: 0.10.0
libtpu: 0.0.40
codegen_flags: <defaults>
</compile_context>

<pallas_src>
import functools

import jax
import jax.numpy as jnp
from jax.experimental import pallas as pl
from jax.experimental.pallas import tpu as pltpu

# ------------------------- module hyper-parameters -------------------------
LATENT = 16          # latent_dims
NUM_CLASSES = 4      # num_classes
NUM_SYMBOLS = 4      # num_symbols
MAX_LENGTH = 8       # max_length
L_CONST = 8          # self.l
D_EQ = MAX_LENGTH * NUM_SYMBOLS            # 32
D_CAT = D_EQ + L_CONST                     # 40

D_IN = 64    # packed input slab : [one-hot eq 0:32 | eps 32:48 | x_c 48 | pad]
D_OUT = 128  # packed output slab: [y_e 0:4 | y_c 4 | pad | z 16:32 | mean 32:48
             #                      | logvar 48:64 | pad 64:128]


# ------------------------------- the kernel --------------------------------
def vae_classify_kernel(
    x_ref,                       # (TB, 64) packed activations
    w1, b1, w2, b2, w3, b3,      # fused merged encoder (mean || logvar)
    d1w, d1b, d2w, d2b,          # decoder trunk
    hw, hb,                      # fused linear decoder head (y_e | y_c)
    out_ref,                     # (TB, 128) packed outputs
):
    f32 = jnp.float32
    x = x_ref[...]                                     # (TB, 64)
    eps = x[:, D_EQ:D_EQ + LATENT]                     # (TB, 16)

    # Fused encoder: embedding + encode_constants folded into layer 1,
    # mean and logvar branches computed side-by-side in one matmul per level.
    h = jnp.dot(x, w1[...], preferred_element_type=f32) + b1[...]      # (TB, 256)
    h = jnp.maximum(h, 0.0)
    h = jnp.dot(h, w2[...], preferred_element_type=f32) + b2[...]      # (TB, 128)
    h = jnp.maximum(h, 0.0)
    ml = jnp.dot(h, w3[...], preferred_element_type=f32) + b3[...]     # (TB, 32) = [mean | logvar]

    mean = ml[:, :LATENT]
    logvar = ml[:, LATENT:]
    # reparameterize: z = mean + eps * exp(0.5 * logvar)    (exp -> EUP slot)
    z = mean + eps * jnp.exp(0.5 * logvar)                             # (TB, 16)

    # Decoder trunk (two ReLU layers).
    h = jnp.maximum(jnp.dot(z, d1w[...], preferred_element_type=f32) + d1b[...], 0.0)
    h = jnp.maximum(jnp.dot(h, d2w[...], preferred_element_type=f32) + d2b[...], 0.0)

    # Fused purely-linear head: decoder L3 -> decode_eq -> decode_constants.
    # Columns: [y_e (4) | y_c (1) | zeros (11)].
    head = jnp.dot(h, hw[...], preferred_element_type=f32) + hb[...]   # (TB, 16)

    # Single lane-dense (128-wide, unmasked) store of all outputs.
    pad = jnp.zeros((head.shape[0], D_OUT - 64), f32)
    out_ref[...] = jnp.concatenate([head, z, ml, pad], axis=1)         # (TB, 128)


# --------------------------- parameter creation -----------------------------
def init_params(key):
    """Deterministic PyTorch-Linear-style init; weights stored as (in, out)."""
    keys = iter(jax.random.split(key, 32))

    def lin(fan_in, fan_out):
        k_w, k_b = next(keys), next(keys)
        bound = float(fan_in) ** -0.5
        w = jax.random.uniform(k_w, (fan_in, fan_out), jnp.float32, -bound, bound)
        b = jax.random.uniform(k_b, (1, fan_out), jnp.float32, -bound, bound)
        return w, b

    emb_w, emb_b = lin(D_EQ, D_EQ)            # embedding_equation
    encc_w, encc_b = lin(1, L_CONST)          # encode_constants
    m1_w, m1_b = lin(D_CAT, 128)              # encoder_layers_mean
    m2_w, m2_b = lin(128, 64)
    m3_w, m3_b = lin(64, LATENT)
    v1_w, v1_b = lin(D_CAT, 128)              # encoder_layers_logvar
    v2_w, v2_b = lin(128, 64)
    v3_w, v3_b = lin(64, LATENT)
    d1_w, d1_b = lin(LATENT, 64)              # decoder_layers
    d2_w, d2_b = lin(64, 64)
    d3_w, d3_b = lin(64, D_CAT)
    e1_w, e1_b = lin(D_EQ, 64)                # decode_eq
    e2_w, e2_b = lin(64, NUM_CLASSES)
    c_w, c_b = lin(L_CONST, 1)                # decode_constants

    return [emb_w, emb_b, encc_w, encc_b,
            m1_w, m1_b, m2_w, m2_b, m3_w, m3_b,
            v1_w, v1_b, v2_w, v2_b, v3_w, v3_b,
            d1_w, d1_b, d2_w, d2_b, d3_w, d3_b,
            e1_w, e1_b, e2_w, e2_b, c_w, c_b]


def fuse_params(p):
    """Exact algebraic re-parameterization for the kernel (done once, host side)."""
    (emb_w, emb_b, encc_w, encc_b,
     m1_w, m1_b, m2_w, m2_b, m3_w, m3_b,
     v1_w, v1_b, v2_w, v2_b, v3_w, v3_b,
     d1_w, d1_b, d2_w, d2_b, d3_w, d3_b,
     e1_w, e1_b, e2_w, e2_b, c_w, c_b) = p

    # --- encoder layer 1: fold embedding_equation + encode_constants ---
    # h1 = cat(xe@emb_w+emb_b, xc@encc_w+encc_b) @ W1 + b1
    #    = xe @ (emb_w@W1_eq) + xc @ (encc_w@W1_c) + (emb_b@W1_eq + encc_b@W1_c + b1)
    def fuse_l1(w1, b1):
        w_e = emb_w @ w1[:D_EQ]                                   # (32, 128)
        w_c = encc_w @ w1[D_EQ:]                                  # (1, 128)
        b = emb_b @ w1[:D_EQ] + encc_b @ w1[D_EQ:] + b1           # (1, 128)
        w_full = jnp.zeros((D_IN, 128), jnp.float32)
        w_full = w_full.at[:D_EQ].set(w_e)                        # eq one-hot rows
        w_full = w_full.at[D_EQ + LATENT].set(w_c[0])             # x_c row (eps rows stay 0)
        return w_full, b

    w1m, b1m = fuse_l1(m1_w, m1_b)
    w1v, b1v = fuse_l1(v1_w, v1_b)
    w1 = jnp.concatenate([w1m, w1v], axis=1)                      # (64, 256)
    b1 = jnp.concatenate([b1m, b1v], axis=1)                      # (1, 256)

    def block_diag(a, b):
        z_top = jnp.zeros((a.shape[0], b.shape[1]), jnp.float32)
        z_bot = jnp.zeros((b.shape[0], a.shape[1]), jnp.float32)
        return jnp.concatenate(
            [jnp.concatenate([a, z_top], axis=1),
             jnp.concatenate([z_bot, b], axis=1)], axis=0)

    w2 = block_diag(m2_w, v2_w)                                   # (256, 128)
    b2 = jnp.concatenate([m2_b, v2_b], axis=1)                    # (1, 128)
    w3 = block_diag(m3_w, v3_w)                                   # (128, 32)
    b3 = jnp.concatenate([m3_b, v3_b], axis=1)                    # (1, 32)  -> [mean | logvar]

    # --- decoder head: d3 -> split -> decode_eq -> decode_constants (all linear) ---
    d3e_w, d3c_w = d3_w[:, :D_EQ], d3_w[:, D_EQ:]
    d3e_b, d3c_b = d3_b[:, :D_EQ], d3_b[:, D_EQ:]
    we = d3e_w @ e1_w @ e2_w                                      # (64, 4)
    be = d3e_b @ e1_w @ e2_w + e1_b @ e2_w + e2_b                 # (1, 4)
    wc = d3c_w @ c_w                                              # (64, 1)
    bc = d3c_b @ c_w + c_b                                        # (1, 1)
    hw = jnp.zeros((64, 16), jnp.float32)
    hw = hw.at[:, :NUM_CLASSES].set(we)
    hw = hw.at[:, NUM_CLASSES:NUM_CLASSES + 1].set(wc)
    hb = jnp.zeros((1, 16), jnp.float32)
    hb = hb.at[:, :NUM_CLASSES].set(be)
    hb = hb.at[:, NUM_CLASSES:NUM_CLASSES + 1].set(bc)

    return [w1, b1, w2, b2, w3, b3, d1_w, d1_b, d2_w, d2_b, hw, hb]


# ------------------------------- the wrapper --------------------------------
@functools.partial(jax.jit, static_argnames=("tb",))
def vae_classify_forward(x_e_tokens, x_c, eps, fused, tb=1024):
    B = x_e_tokens.shape[0]
    # one-hot + Flatten(1)  (glue), then pack all activations lane-dense.
    xe = jax.nn.one_hot(x_e_tokens, NUM_SYMBOLS, dtype=jnp.float32).reshape(B, D_EQ)
    pad_lanes = D_IN - (D_EQ + LATENT + 1)
    slab = jnp.concatenate(
        [xe, eps, x_c, jnp.zeros((B, pad_lanes), jnp.float32)], axis=1)  # (B, 64)

    # Batch tile: multiple of 8 sublanes, capped at `tb` rows; pad batch to tile.
    tb_needed = max(8, ((B + 7) // 8) * 8)
    TB = min(tb, tb_needed)
    B_pad = ((B + TB - 1) // TB) * TB
    if B_pad != B:
        slab = jnp.pad(slab, ((0, B_pad - B), (0, 0)))

    grid = (B_pad // TB,)
    act_spec = pl.BlockSpec((TB, D_IN), lambda i: (i, 0))
    out_spec = pl.BlockSpec((TB, D_OUT), lambda i: (i, 0))

    def w_spec(arr):
        # full-array block, constant index -> stays VMEM-resident across steps
        return pl.BlockSpec(arr.shape, lambda i: (0,) * arr.ndim)

    fn = pl.pallas_call(
        vae_classify_kernel,
        out_shape=jax.ShapeDtypeStruct((B_pad, D_OUT), jnp.float32),
        grid=grid,
        in_specs=[act_spec] + [w_spec(w) for w in fused],
        out_specs=out_spec,
        compiler_params=pltpu.CompilerParams(
            dimension_semantics=("parallel",)),
    )
    out = fn(slab, *fused)

    y_e = out[:B, 0:NUM_CLASSES]
    y_c = out[:B, NUM_CLASSES:NUM_CLASSES + 1]
    z = out[:B, 16:32]
    mean = out[:B, 32:48]
    logvar = out[:B, 48:64]
    return (y_e, y_c), z, mean, logvar


# ---------------------------- pure-JAX reference ----------------------------
def reference_forward(x_e_tokens, x_c, eps, p):
    (emb_w, emb_b, encc_w, encc_b,
     m1_w, m1_b, m2_w, m2_b, m3_w, m3_b,
     v1_w, v1_b, v2_w, v2_b, v3_w, v3_b,
     d1_w, d1_b, d2_w, d2_b, d3_w, d3_b,
     e1_w, e1_b, e2_w, e2_b, c_w, c_b) = p
    B = x_e_tokens.shape[0]
    xe = jax.nn.one_hot(x_e_tokens, NUM_SYMBOLS, dtype=jnp.float32).reshape(B, D_EQ)
    xe = xe @ emb_w + emb_b
    xc = x_c @ encc_w + encc_b
    x = jnp.concatenate([xe, xc], axis=1)
    hm = jnp.maximum(x @ m1_w + m1_b, 0.0)
    hm = jnp.maximum(hm @ m2_w + m2_b, 0.0)
    mean = hm @ m3_w + m3_b
    hv = jnp.maximum(x @ v1_w + v1_b, 0.0)
    hv = jnp.maximum(hv @ v2_w + v2_b, 0.0)
    logvar = hv @ v3_w + v3_b
    z = mean + eps * jnp.exp(0.5 * logvar)
    h = jnp.maximum(z @ d1_w + d1_b, 0.0)
    h = jnp.maximum(h @ d2_w + d2_b, 0.0)
    y = h @ d3_w + d3_b
    y_e, y_c = y[:, :D_EQ], y[:, D_EQ:]
    y_e = (y_e @ e1_w + e1_b) @ e2_w + e2_b
    y_c = y_c @ c_w + c_b
    return y_e, y_c, z, mean, logvar


# ----------------------------------- main ------------------------------------
if __name__ == "__main__":
    key = jax.random.PRNGKey(0)
    (k_param, k_eq, k_const, k_eps,
     k_eq2, k_const2, k_eps2) = jax.random.split(key, 7)

    raw_params = init_params(k_param)
    fused_params = fuse_params(raw_params)

    # Small test (batch=2, single grid step padded to 8 rows).
    B = 2
    x_e = jax.random.randint(k_eq, (B, MAX_LENGTH), 0, NUM_SYMBOLS, dtype=jnp.int32)
    x_c = jax.random.normal(k_const, (B, 1), dtype=jnp.float32)
    # TODO(synk): torch draws eps in-module via randn_like; we take it as an input
    # for deterministic comparison (pltpu.prng_* could generate it in-kernel).
    eps = jax.random.normal(k_eps, (B, LATENT), dtype=jnp.float32)

    (y_e, y_c), z, mean, logvar = jax.block_until_ready(
        vae_classify_forward(x_e, x_c, eps, fused_params)
    )
    ref = reference_forward(x_e, x_c, eps, raw_params)
    for got, want in zip((y_e, y_c, z, mean, logvar), ref):
        assert got.shape == want.shape and got.dtype == want.dtype
        # fused algebra reorders f32 accumulation -> slightly looser tolerance
        assert jnp.allclose(got, want, atol=1e-3, rtol=1e-3), "mismatch vs reference"

    # Larger, non-tile-multiple batch exercising the multi-step pipelined grid.
    B2 = 300
    x_e2 = jax.random.randint(k_eq2, (B2, MAX_LENGTH), 0, NUM_SYMBOLS, dtype=jnp.int32)
    x_c2 = jax.random.normal(k_const2, (B2, 1), dtype=jnp.float32)
    eps2 = jax.random.normal(k_eps2, (B2, LATENT), dtype=jnp.float32)
    (y_e2, y_c2), z2, mean2, logvar2 = jax.block_until_ready(
        vae_classify_forward(x_e2, x_c2, eps2, fused_params, tb=128)
    )
    ref2 = reference_forward(x_e2, x_c2, eps2, raw_params)
    for got, want in zip((y_e2, y_c2, z2, mean2, logvar2), ref2):
        assert got.shape == want.shape and got.dtype == want.dtype
        assert jnp.allclose(got, want, atol=1e-3, rtol=1e-3), "mismatch vs reference (tiled)"

    print("KERNEL_OK")
</pallas_src>

<mosaic_0001>
module attributes {stable_mosaic.version = 11 : i64} {
  func.func @vae_classify_kernel(%arg0: i32, %arg1: memref<8x64xf32, #tpu.memory_space<vmem>>, %arg2: memref<64x256xf32, #tpu.memory_space<vmem>>, %arg3: memref<1x256xf32, #tpu.memory_space<vmem>>, %arg4: memref<256x128xf32, #tpu.memory_space<vmem>>, %arg5: memref<1x128xf32, #tpu.memory_space<vmem>>, %arg6: memref<128x32xf32, #tpu.memory_space<vmem>>, %arg7: memref<1x32xf32, #tpu.memory_space<vmem>>, %arg8: memref<16x64xf32, #tpu.memory_space<vmem>>, %arg9: memref<1x64xf32, #tpu.memory_space<vmem>>, %arg10: memref<64x64xf32, #tpu.memory_space<vmem>>, %arg11: memref<1x64xf32, #tpu.memory_space<vmem>>, %arg12: memref<64x16xf32, #tpu.memory_space<vmem>>, %arg13: memref<1x16xf32, #tpu.memory_space<vmem>>, %arg14: memref<8x128xf32, #tpu.memory_space<vmem>>) attributes {dimension_semantics = [#tpu.dimension_semantics<parallel>], iteration_bounds = array<i64: 1>, scalar_prefetch = 0 : i64, scratch_operands = 0 : i64, tpu.core_type = #tpu.core_type<tc>, window_params = [{transform_indices = @transform_0, window_bounds = array<i64: 8, 64>}, {pipeline_mode = #tpu.pipeline_mode<synchronous>, transform_indices = @transform_1, window_bounds = array<i64: 64, 256>}, {pipeline_mode = #tpu.pipeline_mode<synchronous>, transform_indices = @transform_2, window_bounds = array<i64: 1, 256>}, {pipeline_mode = #tpu.pipeline_mode<synchronous>, transform_indices = @transform_3, window_bounds = array<i64: 256, 128>}, {pipeline_mode = #tpu.pipeline_mode<synchronous>, transform_indices = @transform_4, window_bounds = array<i64: 1, 128>}, {pipeline_mode = #tpu.pipeline_mode<synchronous>, transform_indices = @transform_5, window_bounds = array<i64: 128, 32>}, {pipeline_mode = #tpu.pipeline_mode<synchronous>, transform_indices = @transform_6, window_bounds = array<i64: 1, 32>}, {pipeline_mode = #tpu.pipeline_mode<synchronous>, transform_indices = @transform_7, window_bounds = array<i64: 16, 64>}, {pipeline_mode = #tpu.pipeline_mode<synchronous>, transform_indices = @transform_8, window_bounds = array<i64: 1, 64>}, {pipeline_mode = #tpu.pipeline_mode<synchronous>, transform_indices = @transform_9, window_bounds = array<i64: 64, 64>}, {pipeline_mode = #tpu.pipeline_mode<synchronous>, transform_indices = @transform_10, window_bounds = array<i64: 1, 64>}, {pipeline_mode = #tpu.pipeline_mode<synchronous>, transform_indices = @transform_11, window_bounds = array<i64: 64, 16>}, {pipeline_mode = #tpu.pipeline_mode<synchronous>, transform_indices = @transform_12, window_bounds = array<i64: 1, 16>}, {transform_indices = @transform_13, window_bounds = array<i64: 8, 128>}]} {
    %c0 = arith.constant 0 : index
    %c0_0 = arith.constant 0 : index
    %0 = vector.load %arg1[%c0, %c0_0] : memref<8x64xf32, #tpu.memory_space<vmem>>, vector<8x64xf32>
    %1 = vector.extract_strided_slice %0 {offsets = [0, 32], sizes = [8, 16], strides = [1, 1]} : vector<8x64xf32> to vector<8x16xf32>
    %c0_1 = arith.constant 0 : index
    %c0_2 = arith.constant 0 : index
    %2 = vector.load %arg2[%c0_1, %c0_2] : memref<64x256xf32, #tpu.memory_space<vmem>>, vector<64x256xf32>
    %cst = arith.constant dense<0.000000e+00> : vector<8x256xf32>
    %3 = tpu.matmul %0, %2, %cst {dimension_numbers = #tpu.dot_dimension_numbers<[1], [0], [0], [1], [0, 0, 1, 1], [], []>} : vector<8x64xf32>, vector<64x256xf32>, vector<8x256xf32> -> vector<8x256xf32>
    %c0_3 = arith.constant 0 : index
    %c0_4 = arith.constant 0 : index
    %4 = vector.load %arg3[%c0_3, %c0_4] : memref<1x256xf32, #tpu.memory_space<vmem>>, vector<1x256xf32>
    %5 = vector.broadcast %4 : vector<1x256xf32> to vector<8x256xf32>
    %6 = arith.addf %3, %5 : vector<8x256xf32>
    %cst_5 = arith.constant 0.000000e+00 : f32
    %7 = vector.broadcast %cst_5 : f32 to vector<8x256xf32>
    %8 = arith.maximumf %6, %7 : vector<8x256xf32>
    %c0_6 = arith.constant 0 : index
    %c0_7 = arith.constant 0 : index
    %9 = vector.load %arg4[%c0_6, %c0_7] : memref<256x128xf32, #tpu.memory_space<vmem>>, vector<256x128xf32>
    %cst_8 = arith.constant dense<0.000000e+00> : vector<8x128xf32>
    %10 = tpu.matmul %8, %9, %cst_8 {dimension_numbers = #tpu.dot_dimension_numbers<[1], [0], [0], [1], [0, 0, 1, 1], [], []>} : vector<8x256xf32>, vector<256x128xf32>, vector<8x128xf32> -> vector<8x128xf32>
    %c0_9 = arith.constant 0 : index
    %c0_10 = arith.constant 0 : index
    %11 = vector.load %arg5[%c0_9, %c0_10] : memref<1x128xf32, #tpu.memory_space<vmem>>, vector<1x128xf32>
    %12 = vector.broadcast %11 : vector<1x128xf32> to vector<8x128xf32>
    %13 = arith.addf %10, %12 : vector<8x128xf32>
    %cst_11 = arith.constant 0.000000e+00 : f32
    %14 = vector.broadcast %cst_11 : f32 to vector<8x128xf32>
    %15 = arith.maximumf %13, %14 : vector<8x128xf32>
    %c0_12 = arith.constant 0 : index
    %c0_13 = arith.constant 0 : index
    %16 = vector.load %arg6[%c0_12, %c0_13] : memref<128x32xf32, #tpu.memory_space<vmem>>, vector<128x32xf32>
    %cst_14 = arith.constant dense<0.000000e+00> : vector<8x32xf32>
    %17 = tpu.matmul %15, %16, %cst_14 {dimension_numbers = #tpu.dot_dimension_numbers<[1], [0], [0], [1], [0, 0, 1, 1], [], []>} : vector<8x128xf32>, vector<128x32xf32>, vector<8x32xf32> -> vector<8x32xf32>
    %c0_15 = arith.constant 0 : index
    %c0_16 = arith.constant 0 : index
    %18 = vector.load %arg7[%c0_15, %c0_16] : memref<1x32xf32, #tpu.memory_space<vmem>>, vector<1x32xf32>
    %19 = vector.broadcast %18 : vector<1x32xf32> to vector<8x32xf32>
    %20 = arith.addf %17, %19 : vector<8x32xf32>
    %21 = vector.extract_strided_slice %20 {offsets = [0, 0], sizes = [8, 16], strides = [1, 1]} : vector<8x32xf32> to vector<8x16xf32>
    %22 = vector.extract_strided_slice %20 {offsets = [0, 16], sizes = [8, 16], strides = [1, 1]} : vector<8x32xf32> to vector<8x16xf32>
    %cst_17 = arith.constant 5.000000e-01 : f32
    %23 = vector.broadcast %cst_17 : f32 to vector<8x16xf32>
    %24 = arith.mulf %23, %22 : vector<8x16xf32>
    %25 = math.exp %24 : vector<8x16xf32>
    %26 = arith.mulf %1, %25 : vector<8x16xf32>
    %27 = arith.addf %21, %26 : vector<8x16xf32>
    %c0_18 = arith.constant 0 : index
    %c0_19 = arith.constant 0 : index
    %28 = vector.load %arg8[%c0_18, %c0_19] : memref<16x64xf32, #tpu.memory_space<vmem>>, vector<16x64xf32>
    %cst_20 = arith.constant dense<0.000000e+00> : vector<8x64xf32>
    %29 = tpu.matmul %27, %28, %cst_20 {dimension_numbers = #tpu.dot_dimension_numbers<[1], [0], [0], [1], [0, 0, 1, 1], [], []>} : vector<8x16xf32>, vector<16x64xf32>, vector<8x64xf32> -> vector<8x64xf32>
    %c0_21 = arith.constant 0 : index
    %c0_22 = arith.constant 0 : index
    %30 = vector.load %arg9[%c0_21, %c0_22] : memref<1x64xf32, #tpu.memory_space<vmem>>, vector<1x64xf32>
    %31 = vector.broadcast %30 : vector<1x64xf32> to vector<8x64xf32>
    %32 = arith.addf %29, %31 : vector<8x64xf32>
    %cst_23 = arith.constant 0.000000e+00 : f32
    %33 = vector.broadcast %cst_23 : f32 to vector<8x64xf32>
    %34 = arith.maximumf %32, %33 : vector<8x64xf32>
    %c0_24 = arith.constant 0 : index
    %c0_25 = arith.constant 0 : index
    %35 = vector.load %arg10[%c0_24, %c0_25] : memref<64x64xf32, #tpu.memory_space<vmem>>, vector<64x64xf32>
    %cst_26 = arith.constant dense<0.000000e+00> : vector<8x64xf32>
    %36 = tpu.matmul %34, %35, %cst_26 {dimension_numbers = #tpu.dot_dimension_numbers<[1], [0], [0], [1], [0, 0, 1, 1], [], []>} : vector<8x64xf32>, vector<64x64xf32>, vector<8x64xf32> -> vector<8x64xf32>
    %c0_27 = arith.constant 0 : index
    %c0_28 = arith.constant 0 : index
    %37 = vector.load %arg11[%c0_27, %c0_28] : memref<1x64xf32, #tpu.memory_space<vmem>>, vector<1x64xf32>
    %38 = vector.broadcast %37 : vector<1x64xf32> to vector<8x64xf32>
    %39 = arith.addf %36, %38 : vector<8x64xf32>
    %cst_29 = arith.constant 0.000000e+00 : f32
    %40 = vector.broadcast %cst_29 : f32 to vector<8x64xf32>
    %41 = arith.maximumf %39, %40 : vector<8x64xf32>
    %c0_30 = arith.constant 0 : index
    %c0_31 = arith.constant 0 : index
    %42 = vector.load %arg12[%c0_30, %c0_31] : memref<64x16xf32, #tpu.memory_space<vmem>>, vector<64x16xf32>
    %cst_32 = arith.constant dense<0.000000e+00> : vector<8x16xf32>
    %43 = tpu.matmul %41, %42, %cst_32 {dimension_numbers = #tpu.dot_dimension_numbers<[1], [0], [0], [1], [0, 0, 1, 1], [], []>} : vector<8x64xf32>, vector<64x16xf32>, vector<8x16xf32> -> vector<8x16xf32>
    %c0_33 = arith.constant 0 : index
    %c0_34 = arith.constant 0 : index
    %44 = vector.load %arg13[%c0_33, %c0_34] : memref<1x16xf32, #tpu.memory_space<vmem>>, vector<1x16xf32>
    %45 = vector.broadcast %44 : vector<1x16xf32> to vector<8x16xf32>
    %46 = arith.addf %43, %45 : vector<8x16xf32>
    %cst_35 = arith.constant 0.000000e+00 : f32
    %47 = vector.broadcast %cst_35 : f32 to vector<8x64xf32>
    %48 = tpu.concatenate %46, %27, %20, %47 in 1 : vector<8x16xf32>, vector<8x16xf32>, vector<8x32xf32>, vector<8x64xf32> -> vector<8x128xf32>
    %c0_36 = arith.constant 0 : index
    %c0_37 = arith.constant 0 : index
    %49 = vector.load %arg14[%c0_36, %c0_37] : memref<8x128xf32, #tpu.memory_space<vmem>>, vector<8x128xf32>
    tpu.vector_store %arg14[%c0_36, %c0_37], %48 {strides = array<i32>} : memref<8x128xf32, #tpu.memory_space<vmem>>, vector<8x128xf32>,
    return
  }
  func.func @transform_0(%arg0: i32) -> (i32, i32) {
    %c0_i32 = arith.constant 0 : i32
    %c0_i32_0 = arith.constant 0 : i32
    return %arg0, %c0_i32 : i32, i32
  }
  func.func @transform_1(%arg0: i32) -> (i32, i32) {
    %c0_i32 = arith.constant 0 : i32
    %c0_i32_0 = arith.constant 0 : i32
    %c0_i32_1 = arith.constant 0 : i32
    return %c0_i32, %c0_i32_0 : i32, i32
  }
  func.func @transform_2(%arg0: i32) -> (i32, i32) {
    %c0_i32 = arith.constant 0 : i32
    %c0_i32_0 = arith.constant 0 : i32
    %c0_i32_1 = arith.constant 0 : i32
    return %c0_i32, %c0_i32_0 : i32, i32
  }
  func.func @transform_3(%arg0: i32) -> (i32, i32) {
    %c0_i32 = arith.constant 0 : i32
    %c0_i32_0 = arith.constant 0 : i32
    %c0_i32_1 = arith.constant 0 : i32
    return %c0_i32, %c0_i32_0 : i32, i32
  }
  func.func @transform_4(%arg0: i32) -> (i32, i32) {
    %c0_i32 = arith.constant 0 : i32
    %c0_i32_0 = arith.constant 0 : i32
    %c0_i32_1 = arith.constant 0 : i32
    return %c0_i32, %c0_i32_0 : i32, i32
  }
  func.func @transform_5(%arg0: i32) -> (i32, i32) {
    %c0_i32 = arith.constant 0 : i32
    %c0_i32_0 = arith.constant 0 : i32
    %c0_i32_1 = arith.constant 0 : i32
    return %c0_i32, %c0_i32_0 : i32, i32
  }
  func.func @transform_6(%arg0: i32) -> (i32, i32) {
    %c0_i32 = arith.constant 0 : i32
    %c0_i32_0 = arith.constant 0 : i32
    %c0_i32_1 = arith.constant 0 : i32
    return %c0_i32, %c0_i32_0 : i32, i32
  }
  func.func @transform_7(%arg0: i32) -> (i32, i32) {
    %c0_i32 = arith.constant 0 : i32
    %c0_i32_0 = arith.constant 0 : i32
    %c0_i32_1 = arith.constant 0 : i32
    return %c0_i32, %c0_i32_0 : i32, i32
  }
  func.func @transform_8(%arg0: i32) -> (i32, i32) {
    %c0_i32 = arith.constant 0 : i32
    %c0_i32_0 = arith.constant 0 : i32
    %c0_i32_1 = arith.constant 0 : i32
    return %c0_i32, %c0_i32_0 : i32, i32
  }
  func.func @transform_9(%arg0: i32) -> (i32, i32) {
    %c0_i32 = arith.constant 0 : i32
    %c0_i32_0 = arith.constant 0 : i32
    %c0_i32_1 = arith.constant 0 : i32
    return %c0_i32, %c0_i32_0 : i32, i32
  }
  func.func @transform_10(%arg0: i32) -> (i32, i32) {
    %c0_i32 = arith.constant 0 : i32
    %c0_i32_0 = arith.constant 0 : i32
    %c0_i32_1 = arith.constant 0 : i32
    return %c0_i32, %c0_i32_0 : i32, i32
  }
  func.func @transform_11(%arg0: i32) -> (i32, i32) {
    %c0_i32 = arith.constant 0 : i32
    %c0_i32_0 = arith.constant 0 : i32
    %c0_i32_1 = arith.constant 0 : i32
    return %c0_i32, %c0_i32_0 : i32, i32
  }
  func.func @transform_12(%arg0: i32) -> (i32, i32) {
    %c0_i32 = arith.constant 0 : i32
    %c0_i32_0 = arith.constant 0 : i32
    %c0_i32_1 = arith.constant 0 : i32
    return %c0_i32, %c0_i32_0 : i32, i32
  }
  func.func @transform_13(%arg0: i32) -> (i32, i32) {
    %c0_i32 = arith.constant 0 : i32
    %c0_i32_0 = arith.constant 0 : i32
    return %arg0, %c0_i32 : i32, i32
  }
}

</mosaic_0001>

<llo_original>
// kernel: vae_classify_forward.1
$region0: #{vae_classify_forward.1}
  #allocation0 [shape = 'u32[]', space=smem, size = 0x4, offset = 0x4, fixed_abs, tag = 'smem constant byte address 0x4 - core index']
  #allocation1 [shape = 'u32[72,128]{1,0:T(1,128)}', space=vmem, size = 0x9000, scoped, tag = 'internal scratch']
  %s0 = inlined_call_operand.vmem [shape: f32[8,64], index: 0, kind: input, shape index: {}]
  %s1 = inlined_call_operand.vmem [shape: f32[64,256], index: 1, kind: input, shape index: {}]
  %s2 = inlined_call_operand.vmem [shape: f32[1,256], index: 2, kind: input, shape index: {}]
  %s3 = inlined_call_operand.hbm [shape: f32[256,128], index: 3, kind: input, shape index: {}]
  %s4 = inlined_call_operand.vmem [shape: f32[1,128], index: 4, kind: input, shape index: {}]
  %s5 = inlined_call_operand.vmem [shape: f32[128,32], index: 5, kind: input, shape index: {}]
  %s6 = inlined_call_operand.vmem [shape: f32[1,32], index: 6, kind: input, shape index: {}]
  %s7 = inlined_call_operand.vmem [shape: f32[16,64], index: 7, kind: input, shape index: {}]
  %s8 = inlined_call_operand.vmem [shape: f32[1,64], index: 8, kind: input, shape index: {}]
  %s9 = inlined_call_operand.vmem [shape: f32[64,64], index: 9, kind: input, shape index: {}]
  %s10 = inlined_call_operand.vmem [shape: f32[1,64], index: 10, kind: input, shape index: {}]
  %s11 = inlined_call_operand.vmem [shape: f32[64,16], index: 11, kind: input, shape index: {}]
  %s12 = inlined_call_operand.vmem [shape: f32[1,16], index: 12, kind: input, shape index: {}]
  %s13 = inlined_call_operand.vmem [shape: f32[8,128], index: 13, kind: output, shape index: {}]
  %s14 = sld [smem:[#allocation0]]
  $region66: #{vae_classify_forward.1} parent=0
    _
  %s16 = ssub.s32 1, %s14
  %s17 = scalar_select 0, %s16, %s14
  $region1: #{vae_classify_forward.1} parent=0
    #allocation2 [shape = 'u8[131072]{0}', space=vmem, size = 0x20000, scoped, tag = 'input window, operand 3, single buffered']
    #allocation3 [shape = 's32[1]{0}', space=sflag, size = 0x4, scoped, tag = 'scoped memory for vae_classify_forward.1']
    %18 = vsyncpa [#allocation3], 0
    // Predicated region
    $region2: #{vae_classify_forward.1} parent=1 // pred_check
      _
    $region3: #{vae_classify_forward.1} parent=1 // pred_check_branch
      %20 = sbr.rel (0) target = $region5
    $region4: #{vae_classify_forward.1} parent=1 // pred_region
      _
    $region5: #{vae_classify_forward.1} parent=1 // pred_fallthru
      _
    // Predicated region
    $region6: #{vae_classify_forward.1} parent=1 // pred_check
      _
    $region7: #{vae_classify_forward.1} parent=1 // pred_check_branch
      %22 = sbr.rel (0) target = $region9
    $region8: #{vae_classify_forward.1} parent=1 // pred_region
      _
    $region9: #{vae_classify_forward.1} parent=1 // pred_fallthru
      _
    // Predicated region
    $region10: #{vae_classify_forward.1} parent=1 // pred_check
      _
    $region11: #{vae_classify_forward.1} parent=1 // pred_check_branch
      %24 = sbr.rel (0) target = $region13
    $region12: #{vae_classify_forward.1} parent=1 // pred_region
      _
    $region13: #{vae_classify_forward.1} parent=1 // pred_fallthru
      _
    // Predicated region
    $region14: #{vae_classify_forward.1} parent=1 // pred_check
      _
    $region15: #{vae_classify_forward.1} parent=1 // pred_check_branch
      %26 = sbr.rel (0) target = $region17
    $region16: #{vae_classify_forward.1} parent=1 // pred_region
      %28 = vsyncadd [#allocation3], 0
      %s29 = sshll.u32 %s3, 4
      %s30 = int_to_ptr.hbm [resolvable:$true] %s29
      %s31 = sshll.u32 [#allocation2], 4
      %s32 = int_to_ptr.vmem [resolvable:$true] %s31
      %37 = dma.hbm_to_vmem [thread:$0]  %s30, 4096, %s32, [#allocation3], 128, 128, 8
    $region17: #{vae_classify_forward.1} parent=1 // pred_fallthru
      _
    // Predicated region
    $region18: #{vae_classify_forward.1} parent=1 // pred_check
      _
    $region19: #{vae_classify_forward.1} parent=1 // pred_check_branch
      %39 = sbr.rel (0) target = $region21
    $region20: #{vae_classify_forward.1} parent=1 // pred_region
      _
    $region21: #{vae_classify_forward.1} parent=1 // pred_fallthru
      _
    // Predicated region
    $region22: #{vae_classify_forward.1} parent=1 // pred_check
      _
    $region23: #{vae_classify_forward.1} parent=1 // pred_check_branch
      %41 = sbr.rel (0) target = $region25
    $region24: #{vae_classify_forward.1} parent=1 // pred_region
      _
    $region25: #{vae_classify_forward.1} parent=1 // pred_fallthru
      _
    // Predicated region
    $region26: #{vae_classify_forward.1} parent=1 // pred_check
      _
    $region27: #{vae_classify_forward.1} parent=1 // pred_check_branch
      %43 = sbr.rel (0) target = $region29
    $region28: #{vae_classify_forward.1} parent=1 // pred_region
      _
    $region29: #{vae_classify_forward.1} parent=1 // pred_fallthru
      _
    // Predicated region
    $region30: #{vae_classify_forward.1} parent=1 // pred_check
      _
    $region31: #{vae_classify_forward.1} parent=1 // pred_check_branch
      %45 = sbr.rel (0) target = $region33
    $region32: #{vae_classify_forward.1} parent=1 // pred_region
      _
    $region33: #{vae_classify_forward.1} parent=1 // pred_fallthru
      _
    // Predicated region
    $region34: #{vae_classify_forward.1} parent=1 // pred_check
      _
    $region35: #{vae_classify_forward.1} parent=1 // pred_check_branch
      %47 = sbr.rel (0) target = $region37
    $region36: #{vae_classify_forward.1} parent=1 // pred_region
      _
    $region37: #{vae_classify_forward.1} parent=1 // pred_fallthru
      _
    // Predicated region
    $region38: #{vae_classify_forward.1} parent=1 // pred_check
      _
    $region39: #{vae_classify_forward.1} parent=1 // pred_check_branch
      %49 = sbr.rel (0) target = $region41
    $region40: #{vae_classify_forward.1} parent=1 // pred_region
      _
    $region41: #{vae_classify_forward.1} parent=1 // pred_fallthru
      _
    // Predicated region
    $region42: #{vae_classify_forward.1} parent=1 // pred_check
      _
    $region43: #{vae_classify_forward.1} parent=1 // pred_check_branch
      %51 = sbr.rel (0) target = $region45
    $region44: #{vae_classify_forward.1} parent=1 // pred_region
      _
    $region45: #{vae_classify_forward.1} parent=1 // pred_fallthru
      _
    // Predicated region
    $region46: #{vae_classify_forward.1} parent=1 // pred_check
      _
    $region47: #{vae_classify_forward.1} parent=1 // pred_check_branch
      %53 = sbr.rel (0) target = $region49
    $region48: #{vae_classify_forward.1} parent=1 // pred_region
      _
    $region49: #{vae_classify_forward.1} parent=1 // pred_fallthru
      _
    // Predicated region
    $region50: #{vae_classify_forward.1} parent=1 // pred_check
      _
    $region51: #{vae_classify_forward.1} parent=1 // pred_check_branch
      %55 = sbr.rel (0) target = $region53
    $region52: #{vae_classify_forward.1} parent=1 // pred_region
      _
    $region53: #{vae_classify_forward.1} parent=1 // pred_fallthru
      _
    // Predicated region
    $region54: #{vae_classify_forward.1} parent=1 // pred_check
      _
    $region55: #{vae_classify_forward.1} parent=1 // pred_check_branch
      %57 = sbr.rel (0) target = $region57
    $region56: #{vae_classify_forward.1} parent=1 // pred_region
      %59 = dma.done [#allocation3], 4096
    $region57: #{vae_classify_forward.1} parent=1 // pred_fallthru
      _
    %v60 = vld [vmem:[%s0] sm:$0xff]
    %v61 = vld [vmem:[%s1] sm:$0xff]
    %v62 = vld [vmem:[%s1 + $0x8] sm:$0xff]
    %v63 = vld [vmem:[%s1 + $0x10] sm:$0xff]
    %v64 = vld [vmem:[%s1 + $0x18] sm:$0xff]
    %v65 = vld [vmem:[%s1 + $0x20] sm:$0xff]
    %v66 = vld [vmem:[%s1 + $0x28] sm:$0xff]
    %v67 = vld [vmem:[%s1 + $0x30] sm:$0xff]
    %v68 = vld [vmem:[%s1 + $0x38] sm:$0xff]
    %v69 = vld [vmem:[%s1 + $0x40] sm:$0xff]
    %v70 = vld [vmem:[%s1 + $0x48] sm:$0xff]
    %v71 = vld [vmem:[%s1 + $0x50] sm:$0xff]
    %v72 = vld [vmem:[%s1 + $0x58] sm:$0xff]
    %v73 = vld [vmem:[%s1 + $0x60] sm:$0xff]
    %v74 = vld [vmem:[%s1 + $0x68] sm:$0xff]
    %v75 = vld [vmem:[%s1 + $0x70] sm:$0xff]
    %v76 = vld [vmem:[%s1 + $0x78] sm:$0xff]
    %v77 = vld [vmem:[%s2] sm:$0x3]
    %v79 = vperm.slane %v77, 0
    %v80 = vperm.slane %v77, 1
    %vm83 = vcmask 523264
    %v85 = vsel %vm83, %v60, 0
    %87 = vmatpush.msra.mxu0 0.0
    %88 = vmatpush.msra.mxu0 0.0
    %89 = vmatpush.msra.mxu0 0.0
    %90 = vmatpush.msra.mxu0 0.0
    %91 = vmatpush.msra.mxu0 0.0
    %92 = vmatpush.msra.mxu0 0.0
    %93 = vmatpush.msra.mxu0 0.0
    %94 = vmatpush.msra.mxu0 0.0
    %95 = vmatpush.msra.mxu0 %v75
    %96 = vmatpush.msra.mxu0 %v73
    %97 = vmatpush.msra.mxu0 %v71
    %98 = vmatpush.msra.mxu0 %v69
    %99 = vmatpush.msra.mxu0 %v67
    %100 = vmatpush.msra.mxu0 %v65
    %101 = vmatpush.msra.mxu0 %v63
    %102 = vmatpush.msra.mxu0 %v61
    %103 = vmatmul.f32.gmra.mxu0 %v85
    %v104 = vpop.f32.mrf.mxu0
    %v105 = vadd.f32 %v79, %v104
    %106 = vdwg.mxu0
    %107 = vmatpush.msra.mxu0 0.0
    %108 = vmatpush.msra.mxu0 0.0
    %109 = vmatpush.msra.mxu0 0.0
    %110 = vmatpush.msra.mxu0 0.0
    %111 = vmatpush.msra.mxu0 0.0
    %112 = vmatpush.msra.mxu0 0.0
    %113 = vmatpush.msra.mxu0 0.0
    %114 = vmatpush.msra.mxu0 0.0
    %115 = vmatpush.msra.mxu0 %v76
    %116 = vmatpush.msra.mxu0 %v74
    %117 = vmatpush.msra.mxu0 %v72
    %118 = vmatpush.msra.mxu0 %v70
    %119 = vmatpush.msra.mxu0 %v68
    %120 = vmatpush.msra.mxu0 %v66
    %121 = vmatpush.msra.mxu0 %v64
    %122 = vmatpush.msra.mxu0 %v62
    %123 = vmatmul.f32.gmra.mxu0 %v85
    %v124 = vpop.f32.mrf.mxu0
    %v125 = vadd.f32 %v80, %v124
    %126 = vdwg.mxu0
    %v127 = vmax.f32 %v105, 0.0
    %v128 = vmax.f32 %v125, 0.0
    %v129 = vld [vmem:[#allocation2] sm:$0xff]
    %v130 = vld [vmem:[#allocation2 + $0x8] sm:$0xff]
    %v131 = vld [vmem:[#allocation2 + $0x10] sm:$0xff]
    %v132 = vld [vmem:[#allocation2 + $0x18] sm:$0xff]
    %v133 = vld [vmem:[#allocation2 + $0x20] sm:$0xff]
    %v134 = vld [vmem:[#allocation2 + $0x28] sm:$0xff]
    %v135 = vld [vmem:[#allocation2 + $0x30] sm:$0xff]
    %v136 = vld [vmem:[#allocation2 + $0x38] sm:$0xff]
    %v137 = vld [vmem:[#allocation2 + $0x40] sm:$0xff]
    %v138 = vld [vmem:[#allocation2 + $0x48] sm:$0xff]
    %v139 = vld [vmem:[#allocation2 + $0x50] sm:$0xff]
    %v140 = vld [vmem:[#allocation2 + $0x58] sm:$0xff]
    %v141 = vld [vmem:[#allocation2 + $0x60] sm:$0xff]
    %v142 = vld [vmem:[#allocation2 + $0x68] sm:$0xff]
    %v143 = vld [vmem:[#allocation2 + $0x70] sm:$0xff]
    %v144 = vld [vmem:[#allocation2 + $0x78] sm:$0xff]
    %v145 = vld [vmem:[#allocation2 + $0x80] sm:$0xff]
    %v146 = vld [vmem:[#allocation2 + $0x88] sm:$0xff]
    %v147 = vld [vmem:[#allocation2 + $0x90] sm:$0xff]
    %v148 = vld [vmem:[#allocation2 + $0x98] sm:$0xff]
    %v149 = vld [vmem:[#allocation2 + $0xa0] sm:$0xff]
    %v150 = vld [vmem:[#allocation2 + $0xa8] sm:$0xff]
    %v151 = vld [vmem:[#allocation2 + $0xb0] sm:$0xff]
    %v152 = vld [vmem:[#allocation2 + $0xb8] sm:$0xff]
    %v153 = vld [vmem:[#allocation2 + $0xc0] sm:$0xff]
    %v154 = vld [vmem:[#allocation2 + $0xc8] sm:$0xff]
    %v155 = vld [vmem:[#allocation2 + $0xd0] sm:$0xff]
    %v156 = vld [vmem:[#allocation2 + $0xd8] sm:$0xff]
    %v157 = vld [vmem:[#allocation2 + $0xe0] sm:$0xff]
    %v158 = vld [vmem:[#allocation2 + $0xe8] sm:$0xff]
    %v159 = vld [vmem:[#allocation2 + $0xf0] sm:$0xff]
    %v160 = vld [vmem:[#allocation2 + $0xf8] sm:$0xff]
    %v161 = vld [vmem:[%s4] sm:$0x1]
    %v163 = vperm.slane %v161, 0
    %165 = vmatpush.msra.mxu0 %v144
    %166 = vmatpush.msra.mxu0 %v143
    %167 = vmatpush.msra.mxu0 %v142
    %168 = vmatpush.msra.mxu0 %v141
    %169 = vmatpush.msra.mxu0 %v140
    %170 = vmatpush.msra.mxu0 %v139
    %171 = vmatpush.msra.mxu0 %v138
    %172 = vmatpush.msra.mxu0 %v137
    %173 = vmatpush.msra.mxu0 %v136
    %174 = vmatpush.msra.mxu0 %v135
    %175 = vmatpush.msra.mxu0 %v134
    %176 = vmatpush.msra.mxu0 %v133
    %177 = vmatpush.msra.mxu0 %v132
    %178 = vmatpush.msra.mxu0 %v131
    %179 = vmatpush.msra.mxu0 %v130
    %180 = vmatpush.msra.mxu0 %v129
    %181 = vmatmul.f32.gmra.mxu0 %v127
    %v182 = vpop.f32.mrf.mxu0
    %v183 = vadd.f32 %v163, %v182
    %184 = vdwg.mxu0
    %185 = vmatpush.msra.mxu0 %v160
    %186 = vmatpush.msra.mxu0 %v159
    %187 = vmatpush.msra.mxu0 %v158
    %188 = vmatpush.msra.mxu0 %v157
    %189 = vmatpush.msra.mxu0 %v156
    %190 = vmatpush.msra.mxu0 %v155
    %191 = vmatpush.msra.mxu0 %v154
    %192 = vmatpush.msra.mxu0 %v153
    %193 = vmatpush.msra.mxu0 %v152
    %194 = vmatpush.msra.mxu0 %v151
    %195 = vmatpush.msra.mxu0 %v150
    %196 = vmatpush.msra.mxu0 %v149
    %197 = vmatpush.msra.mxu0 %v148
    %198 = vmatpush.msra.mxu0 %v147
    %199 = vmatpush.msra.mxu0 %v146
    %200 = vmatpush.msra.mxu0 %v145
    %201 = vmatmul.f32.gmra.mxu0 %v128
    %v202 = vpop.f32.mrf.mxu0
    %v203 = vadd.f32 %v183, %v202
    %204 = vdwg.mxu0
    %v205 = vmax.f32 %v203, 0.0
    %v206 = vld [vmem:[%s5] sm:$0xff]
    %v207 = vld [vmem:[%s5 + $0x8] sm:$0xff]
    %v208 = vld [vmem:[%s5 + $0x10] sm:$0xff]
    %v209 = vld [vmem:[%s5 + $0x18] sm:$0xff]
    %v210 = vld [vmem:[%s5 + $0x20] sm:$0xff]
    %v211 = vld [vmem:[%s5 + $0x28] sm:$0xff]
    %v212 = vld [vmem:[%s5 + $0x30] sm:$0xff]
    %v213 = vld [vmem:[%s5 + $0x38] sm:$0xff]
    %v214 = vld [vmem:[%s5 + $0x40] sm:$0xff]
    %v215 = vld [vmem:[%s5 + $0x48] sm:$0xff]
    %v216 = vld [vmem:[%s5 + $0x50] sm:$0xff]
    %v217 = vld [vmem:[%s5 + $0x58] sm:$0xff]
    %v218 = vld [vmem:[%s5 + $0x60] sm:$0xff]
    %v219 = vld [vmem:[%s5 + $0x68] sm:$0xff]
    %v220 = vld [vmem:[%s5 + $0x70] sm:$0xff]
    %v221 = vld [vmem:[%s5 + $0x78] sm:$0xff]
    %v222 = vld [vmem:[%s6] sm:$0x1]
    %v224 = vperm.slane %v222, 0
    %226 = vmatpush.msra.mxu0 %v221
    %227 = vmatpush.msra.mxu0 %v220
    %228 = vmatpush.msra.mxu0 %v219
    %229 = vmatpush.msra.mxu0 %v218
    %230 = vmatpush.msra.mxu0 %v217
    %231 = vmatpush.msra.mxu0 %v216
    %232 = vmatpush.msra.mxu0 %v215
    %233 = vmatpush.msra.mxu0 %v214
    %234 = vmatpush.msra.mxu0 %v213
    %235 = vmatpush.msra.mxu0 %v212
    %236 = vmatpush.msra.mxu0 %v211
    %237 = vmatpush.msra.mxu0 %v210
    %238 = vmatpush.msra.mxu0 %v209
    %239 = vmatpush.msra.mxu0 %v208
    %240 = vmatpush.msra.mxu0 %v207
    %241 = vmatpush.msra.mxu0 %v206
    %242 = vmatmul.f32.gmra.mxu0 %v205
    %v243 = vpop.f32.mrf.mxu0
    %v244 = vadd.f32 %v224, %v243
    %245 = vdwg.mxu0
    %v246 = vmul.f32 %v244, 0.5
    %v247 = vmul.f32 %v246, 1.442695
    %v248 = vpow.pop %v247
    %250 = vrot.lane.b32.xlu0 %v248, 16
    %v251 = vpop.permute.xlu0 %250
    %v253 = vmul.f32 %v60, %v251
    %255 = vrot.lane.b32.xlu0 %v253, 96
    %v256 = vpop.permute.xlu0 %255
    %v258 = vadd.f32 %v244, %v256
    %v259 = vld [vmem:[%s7] sm:$0xff]
    %v260 = vld [vmem:[%s7 + $0x8] sm:$0xff]
    %v261 = vld [vmem:[%s8] sm:$0x1]
    %v263 = vperm.slane %v261, 0
    %vm265 = vcmask 130048
    %v267 = vsel %vm265, %v258, 0
    %269 = vmatpush.msra.mxu0 0.0
    %270 = vmatpush.msra.mxu0 0.0
    %271 = vmatpush.msra.mxu0 0.0
    %272 = vmatpush.msra.mxu0 0.0
    %273 = vmatpush.msra.mxu0 0.0
    %274 = vmatpush.msra.mxu0 0.0
    %275 = vmatpush.msra.mxu0 0.0
    %276 = vmatpush.msra.mxu0 0.0
    %277 = vmatpush.msra.mxu0 0.0
    %278 = vmatpush.msra.mxu0 0.0
    %279 = vmatpush.msra.mxu0 0.0
    %280 = vmatpush.msra.mxu0 0.0
    %281 = vmatpush.msra.mxu0 0.0
    %282 = vmatpush.msra.mxu0 0.0
    %283 = vmatpush.msra.mxu0 %v260
    %284 = vmatpush.msra.mxu0 %v259
    %285 = vmatmul.f32.gmra.mxu0 %v267
    %v286 = vpop.f32.mrf.mxu0
    %v287 = vadd.f32 %v263, %v286
    %288 = vdwg.mxu0
    %v289 = vmax.f32 %v287, 0.0
    %v290 = vld [vmem:[%s9] sm:$0xff]
    %v291 = vld [vmem:[%s9 + $0x8] sm:$0xff]
    %v292 = vld [vmem:[%s9 + $0x10] sm:$0xff]
    %v293 = vld [vmem:[%s9 + $0x18] sm:$0xff]
    %v294 = vld [vmem:[%s9 + $0x20] sm:$0xff]
    %v295 = vld [vmem:[%s9 + $0x28] sm:$0xff]
    %v296 = vld [vmem:[%s9 + $0x30] sm:$0xff]
    %v297 = vld [vmem:[%s9 + $0x38] sm:$0xff]
    %v298 = vld [vmem:[%s10] sm:$0x1]
    %v300 = vperm.slane %v298, 0
    %v303 = vsel %vm83, %v289, 0
    %305 = vmatpush.msra.mxu0 0.0
    %306 = vmatpush.msra.mxu0 0.0
    %307 = vmatpush.msra.mxu0 0.0
    %308 = vmatpush.msra.mxu0 0.0
    %309 = vmatpush.msra.mxu0 0.0
    %310 = vmatpush.msra.mxu0 0.0
    %311 = vmatpush.msra.mxu0 0.0
    %312 = vmatpush.msra.mxu0 0.0
    %313 = vmatpush.msra.mxu0 %v297
    %314 = vmatpush.msra.mxu0 %v296
    %315 = vmatpush.msra.mxu0 %v295
    %316 = vmatpush.msra.mxu0 %v294
    %317 = vmatpush.msra.mxu0 %v293
    %318 = vmatpush.msra.mxu0 %v292
    %319 = vmatpush.msra.mxu0 %v291
    %320 = vmatpush.msra.mxu0 %v290
    %321 = vmatmul.f32.gmra.mxu0 %v303
    %v322 = vpop.f32.mrf.mxu0
    %v323 = vadd.f32 %v300, %v322
    %324 = vdwg.mxu0
    %v325 = vmax.f32 %v323, 0.0
    %v326 = vld [vmem:[%s11] sm:$0xff]
    %v327 = vld [vmem:[%s11 + $0x8] sm:$0xff]
    %v328 = vld [vmem:[%s11 + $0x10] sm:$0xff]
    %v329 = vld [vmem:[%s11 + $0x18] sm:$0xff]
    %v330 = vld [vmem:[%s11 + $0x20] sm:$0xff]
    %v331 = vld [vmem:[%s11 + $0x28] sm:$0xff]
    %v332 = vld [vmem:[%s11 + $0x30] sm:$0xff]
    %v333 = vld [vmem:[%s11 + $0x38] sm:$0xff]
    %v334 = vld [vmem:[%s12] sm:$0x1]
    %v336 = vperm.slane %v334, 0
    %v339 = vsel %vm83, %v325, 0
    %341 = vmatpush.msra.mxu0 0.0
    %342 = vmatpush.msra.mxu0 0.0
    %343 = vmatpush.msra.mxu0 0.0
    %344 = vmatpush.msra.mxu0 0.0
    %345 = vmatpush.msra.mxu0 0.0
    %346 = vmatpush.msra.mxu0 0.0
    %347 = vmatpush.msra.mxu0 0.0
    %348 = vmatpush.msra.mxu0 0.0
    %349 = vmatpush.msra.mxu0 %v333
    %350 = vmatpush.msra.mxu0 %v332
    %351 = vmatpush.msra.mxu0 %v331
    %352 = vmatpush.msra.mxu0 %v330
    %353 = vmatpush.msra.mxu0 %v329
    %354 = vmatpush.msra.mxu0 %v328
    %355 = vmatpush.msra.mxu0 %v327
    %356 = vmatpush.msra.mxu0 %v326
    %357 = vmatmul.f32.gmra.mxu0 %v339
    %v358 = vpop.f32.mrf.mxu0
    %v359 = vadd.f32 %v336, %v358
    %360 = vdwg.mxu0
    %361 = vrot.lane.b32.xlu0 %v258, 16
    %v362 = vpop.permute.xlu0 %361
    %365 = vrot.lane.b32.xlu0 %v244, 32
    %v366 = vpop.permute.xlu0 %365
    %v368 = vsel %vm265, %v359, %v362
    %vm369 = vcmask 261120
    %v370 = vsel %vm369, %v368, %v366
    %v371 = vsel %vm83, %v370, 0.0
    %372 = vst [vmem:[%s13] sm:$0xff] %v371
    // Predicated region
    $region58: #{vae_classify_forward.1} parent=1 // pred_check
      _
    $region59: #{vae_classify_forward.1} parent=1 // pred_check_branch
      %374 = sbr.rel (0) target = $region61
    $region60: #{vae_classify_forward.1} parent=1 // pred_region
      _
    $region61: #{vae_classify_forward.1} parent=1 // pred_fallthru
      _
    // Predicated region
    $region62: #{vae_classify_forward.1} parent=1 // pred_check
      _
    $region63: #{vae_classify_forward.1} parent=1 // pred_check_branch
      %376 = sbr.rel (0) target = $region65
    $region64: #{vae_classify_forward.1} parent=1 // pred_region
      _
    $region65: #{vae_classify_forward.1} parent=1 // pred_fallthru
      _
    %377 = vsyncpa [#allocation3], 1

</llo_original>
